<compile_context>
chip_gen: v7x
topology: tpu7x:2x2x1
jax: 0.10.0
libtpu: 0.0.40
codegen_flags: <defaults>
</compile_context>

<pallas_src>
import jax
import jax.numpy as jnp
from jax.experimental import pallas as pl
from jax.experimental.pallas import tpu as pltpu


def _copy_kernel(x_ref, o_ref):
    # Elementwise identity copy of the current VMEM tile.
    o_ref[...] = x_ref[...]


# Lane widths to try for the flattened slab (all multiples of 128, widest
# first -> widest unmasked vst).
_LANE_CANDIDATES = (8192, 4096, 2048, 1024, 512, 256, 128)
# Per-block byte budget: double-buffered input + output ~= 4x this resident,
# i.e. <= 8 MiB, comfortably below the scoped VMEM limit on v5e/v6e/v7x and
# already past the measured HBM-roofline plateau for tiled copies.
_TARGET_BLOCK_BYTES = 2 * 1024 * 1024


def _tiled_copy_2d(x2d: jax.Array, tr: int, tc: int) -> jax.Array:
    """Pipelined HBM->VMEM->HBM copy of a 2D slab using (tr, tc) blocks."""
    rows, cols = x2d.shape
    itemsize = jnp.dtype(x2d.dtype).itemsize
    block_bytes = tr * tc * itemsize
    # Explicit, generation-safe VMEM budget (double-buffered in + out + slack).
    vmem_limit = int(min(64 << 20, max(4 * block_bytes + (2 << 20), 4 << 20)))

    return pl.pallas_call(
        _copy_kernel,
        out_shape=jax.ShapeDtypeStruct((rows, cols), x2d.dtype),
        grid=(pl.cdiv(rows, tr), pl.cdiv(cols, tc)),
        in_specs=[pl.BlockSpec((tr, tc), lambda i, j: (i, j))],
        out_specs=pl.BlockSpec((tr, tc), lambda i, j: (i, j)),
        compiler_params=pltpu.CompilerParams(
            dimension_semantics=("parallel", "parallel"),
            vmem_limit_bytes=vmem_limit,
        ),
    )(x2d)


def squeeze_pallas(x: jax.Array, dim: int = -1) -> jax.Array:
    """Pallas equivalent of torch.Tensor.squeeze(dim=dim)."""
    ndim = x.ndim

    # 0-d tensors: squeeze is a no-op.
    if ndim == 0:
        return x

    d = dim + ndim if dim < 0 else dim
    if not 0 <= d < ndim:
        raise ValueError(f"dim {dim} out of range for rank-{ndim} input")

    # PyTorch semantics: if the dim is not size 1, the tensor is unchanged.
    # Return the input directly -- no kernel launch, no HBM traffic.
    if x.shape[d] != 1:
        return x

    out_shape = x.shape[:d] + x.shape[d + 1:]
    n = int(x.size)

    # Zero-element tensors: pure metadata reshape, nothing to copy.
    if n == 0:
        return jnp.reshape(x, out_shape)

    itemsize = jnp.dtype(x.dtype).itemsize
    # Sub-32-bit dtypes pack along sublanes: keep row tiles a multiple of the
    # native sublane count (8 for f32, 16 for bf16, 32 for int8/fp8).
    packing = max(1, 4 // max(1, itemsize))
    sub_mult = 8 * packing

    # Prefer a lane-dense factoring (cols a multiple of 128) so stores are
    # full-width vst, not masked partial stores.
    cols = next((c for c in _LANE_CANDIDATES if n % c == 0), None)
    if cols is not None:
        rows = n // cols
        max_rows = max(1, _TARGET_BLOCK_BYTES // (cols * itemsize))
        if max_rows >= rows:
            tr = rows                            # full extent -> exempt from (8,128)
        else:
            tr = max(sub_mult, (max_rows // sub_mult) * sub_mult)
        tc = cols                                # full lane extent of the slab
        y2d = _tiled_copy_2d(x.reshape(rows, cols), tr, tc)
    else:
        # Rare odd-sized fallback (total elements not a multiple of 128):
        # single-row slab tiled along lanes; trailing partial block is handled
        # by Pallas masked stores.  Block width 64K lanes keeps VMEM bounded.
        rows, cols = 1, n
        tc = cols if cols <= 128 * 512 else 128 * 512
        y2d = _tiled_copy_2d(x.reshape(rows, cols), 1, tc)

    return y2d.reshape(out_shape)


if __name__ == "__main__":
    key = jax.random.PRNGKey(0)
    k1, k2, k3 = jax.random.split(key, 3)

    # Case 1: default dim=-1 with a trailing singleton (module's common use).
    x1 = jax.random.normal(k1, (2, 4, 16, 1), dtype=jnp.float32)
    y1 = jax.block_until_ready(squeeze_pallas(x1, dim=-1))
    assert y1.shape == (2, 4, 16), f"unexpected shape {y1.shape}"
    assert y1.dtype == x1.dtype
    assert bool(jnp.allclose(y1, x1[..., 0])), "values mismatch (case 1)"

    # Case 2: interior singleton dim.
    x2 = jax.random.normal(k2, (2, 1, 16, 8), dtype=jnp.float32)
    y2 = jax.block_until_ready(squeeze_pallas(x2, dim=1))
    assert y2.shape == (2, 16, 8), f"unexpected shape {y2.shape}"
    assert bool(jnp.allclose(y2, x2[:, 0])), "values mismatch (case 2)"

    # Case 3: no-op squeeze (dim size != 1) -> returned unchanged, no kernel.
    z = jax.block_until_ready(squeeze_pallas(x1, dim=1))
    assert z.shape == x1.shape
    assert bool(jnp.allclose(z, x1)), "values mismatch (no-op case)"

    # Case 4: packed dtype (bf16) with interior singleton; exercises the
    # dtype-aware sublane tiling path.
    x3 = jax.random.normal(k3, (2, 1, 32, 8), dtype=jnp.bfloat16)
    y3 = jax.block_until_ready(squeeze_pallas(x3, dim=1))
    assert y3.shape == (2, 32, 8), f"unexpected shape {y3.shape}"
    assert y3.dtype == jnp.bfloat16
    assert bool(jnp.array_equal(y3, x3[:, 0])), "values mismatch (case 4)"

    print("KERNEL_OK")
</pallas_src>

<mosaic_0001>
module attributes {stable_mosaic.version = 11 : i64} {
  func.func @_copy_kernel(%arg0: i32, %arg1: i32, %arg2: memref<1x128xf32, #tpu.memory_space<vmem>>, %arg3: memref<1x128xf32, #tpu.memory_space<vmem>>) attributes {dimension_semantics = [#tpu.dimension_semantics<parallel>, #tpu.dimension_semantics<parallel>], iteration_bounds = array<i64: 1, 1>, scalar_prefetch = 0 : i64, scratch_operands = 0 : i64, tpu.core_type = #tpu.core_type<tc>, window_params = [{transform_indices = @transform_0, window_bounds = array<i64: 1, 128>}, {transform_indices = @transform_1, window_bounds = array<i64: 1, 128>}]} {
    %c0 = arith.constant 0 : index
    %c0_0 = arith.constant 0 : index
    %0 = vector.load %arg2[%c0, %c0_0] : memref<1x128xf32, #tpu.memory_space<vmem>>, vector<1x128xf32>
    %c0_1 = arith.constant 0 : index
    %c0_2 = arith.constant 0 : index
    %1 = vector.load %arg3[%c0_1, %c0_2] : memref<1x128xf32, #tpu.memory_space<vmem>>, vector<1x128xf32>
    tpu.vector_store %arg3[%c0_1, %c0_2], %0 {strides = array<i32>} : memref<1x128xf32, #tpu.memory_space<vmem>>, vector<1x128xf32>,
    return
  }
  func.func @transform_0(%arg0: i32, %arg1: i32) -> (i32, i32) {
    %c0_i32 = arith.constant 0 : i32
    return %arg0, %arg1 : i32, i32
  }
  func.func @transform_1(%arg0: i32, %arg1: i32) -> (i32, i32) {
    %c0_i32 = arith.constant 0 : i32
    return %arg0, %arg1 : i32, i32
  }
}

</mosaic_0001>

<llo_original>
// kernel: tpu_custom_call.1
$region0: #{tpu_custom_call.1}
  #allocation0 [shape = 'u32[]', space=smem, size = 0x4, offset = 0x4, fixed_abs, tag = 'smem constant byte address 0x4 - core index']
  #allocation1 [shape = 'u32[144,128]{1,0:T(1,128)}', space=vmem, size = 0x12000, scoped, tag = 'internal scratch']
  %s0 = inlined_call_operand.hbm [shape: f32[1,128], index: 0, kind: input, shape index: {}]
  %s1 = inlined_call_operand.hbm [shape: f32[1,128], index: 1, kind: output, shape index: {}]
  %s2 = sld [smem:[#allocation0]]
  $region18: #{tpu_custom_call.1} parent=0
    _
  %s4 = ssub.s32 1, %s2
  %s5 = scalar_select 0, %s4, %s2
  $region1: #{tpu_custom_call.1} parent=0
    #allocation2 [shape = 'u8[512]{0}', space=vmem, size = 0x400, scoped, tag = 'input window, operand 0, single buffered']
    #allocation3 [shape = 's32[1]{0}', space=sflag, size = 0x4, scoped, tag = 'scoped memory for tpu_custom_call.1']
    #allocation4 [shape = 's32[1]{0}', space=sflag, size = 0x4, scoped, tag = 'scoped memory for tpu_custom_call.1']
    #allocation5 [shape = 'u8[512]{0}', space=vmem, size = 0x400, scoped, tag = 'output window, operand 0, single buffered']
    %6 = vsyncpa [#allocation3], 0
    %7 = vsyncpa [#allocation4], 0
    // Predicated region
    $region2: #{tpu_custom_call.1} parent=1 // pred_check
      _
    $region3: #{tpu_custom_call.1} parent=1 // pred_check_branch
      %9 = sbr.rel (0) target = $region5
    $region4: #{tpu_custom_call.1} parent=1 // pred_region
      %s11 = ssub.s32 16, 16
      %12 = vsyncadd [#allocation3], %s11
      %s14 = sshll.u32 [#allocation2], 4
      %s15 = int_to_ptr.vmem [resolvable:$true] %s14
      %17 = dma.hbm_to_vmem [thread:$0]  %s0, 16, %s15, [#allocation3]
    $region5: #{tpu_custom_call.1} parent=1 // pred_fallthru
      _
    // Predicated region
    $region6: #{tpu_custom_call.1} parent=1 // pred_check
      _
    $region7: #{tpu_custom_call.1} parent=1 // pred_check_branch
      %19 = sbr.rel (0) target = $region9
    $region8: #{tpu_custom_call.1} parent=1 // pred_region
      %20 = dma.done [#allocation3], 16
    $region9: #{tpu_custom_call.1} parent=1 // pred_fallthru
      _
    %v21 = vld [vmem:[#allocation2] sm:$0x1]
    %22 = vst [vmem:[#allocation5] sm:$0x1] %v21
    // Predicated region
    $region10: #{tpu_custom_call.1} parent=1 // pred_check
      _
    $region11: #{tpu_custom_call.1} parent=1 // pred_check_branch
      %24 = sbr.rel (0) target = $region13
    $region12: #{tpu_custom_call.1} parent=1 // pred_region
      %s26 = ssub.s32 16, 16
      %27 = vsyncadd [#allocation4], %s26
      %s29 = sshll.u32 [#allocation5], 4
      %s30 = int_to_ptr.vmem [resolvable:$true] %s29
      %32 = dma.vmem_to_hbm [thread:$0]  %s30, 16, %s1, [#allocation4]
    $region13: #{tpu_custom_call.1} parent=1 // pred_fallthru
      _
    // Predicated region
    $region14: #{tpu_custom_call.1} parent=1 // pred_check
      _
    $region15: #{tpu_custom_call.1} parent=1 // pred_check_branch
      %34 = sbr.rel (0) target = $region17
    $region16: #{tpu_custom_call.1} parent=1 // pred_region
      %35 = dma.done [#allocation4], 16
    $region17: #{tpu_custom_call.1} parent=1 // pred_fallthru
      _
    %36 = vsyncpa [#allocation3], 1
    %37 = vsyncpa [#allocation4], 1

</llo_original>
